<compile_context>
chip_gen: v6e
topology: v6e:2x2x1
jax: 0.10.0
libtpu: 0.0.40
codegen_flags: <defaults>
</compile_context>

<pallas_src>
import jax
import jax.numpy as jnp
from jax.experimental import pallas as pl
from jax.experimental.pallas import tpu as pltpu

_SQRT20 = float(20.0 ** 0.5)
_LANE_WIDTH = 1024   # 8 sublanes x 128 lanes of f32 = one vreg-tile worth of elements


def _static_volatility_kernel(t_ref, o_ref):
    # Compute in f32 vregs regardless of the HBM dtype; cast back before storing.
    t = t_ref[...].astype(jnp.float32)
    x = 20.0 * t - 10.0
    # sqrt(20 * sigmoid(x)) == sqrt(20) * rsqrt(1 + exp(-x)).
    # exp / rsqrt go to the EUP slot, the mul/add/mul to the VPU -> at f32/bf16
    # I/O the HBM stream remains the binding resource on v5e/v6e.
    g = _SQRT20 * jax.lax.rsqrt(1.0 + jnp.exp(-x))
    o_ref[...] = g.astype(o_ref.dtype)


def _xla_path(t):
    x = 20.0 * t.astype(jnp.float32) - 10.0
    return (_SQRT20 * jax.lax.rsqrt(1.0 + jnp.exp(-x))).astype(t.dtype)


def _compiler_params():
    return pltpu.CompilerParams(
        dimension_semantics=("parallel",),   # shard the grid across v7x's two TCs
        vmem_limit_bytes=32 << 20,           # 4 MiB blocks x (in+out) x 2 buffers = 16 MiB
    )


def _cost(n, itemsize):
    # Elementwise, bandwidth-bound: ~4 flops + 2 transcendentals per element,
    # one read + one write in the source dtype.
    return pl.CostEstimate(flops=4 * n, transcendentals=2 * n,
                           bytes_accessed=2 * n * itemsize)


def static_volatility(
    t: jax.Array,
    *,
    block_bytes: int = 4 << 20,    # target bytes per block (dtype-aware element count)
    target_grid: int = 4,          # aim for >= 2 grid steps per v7x TensorCore
    min_pallas_elems: int = 65536,
) -> jax.Array:
    """Elementwise g(t) = (20 * sigmoid(-10 + 20 t)) ** 0.5."""
    orig_shape = t.shape
    dtype = t.dtype
    n = t.size
    itemsize = jnp.dtype(dtype).itemsize

    # Tiny inputs (the common (batch, 1) diffusion-time case): a kernel launch
    # costs more than the fused XLA elementwise expression.
    if n == 0 or n < max(min_pallas_elems, _LANE_WIDTH):
        return _xla_path(t)

    if n % _LANE_WIDTH == 0:
        # Lane-aligned: lane-dense 2-D (rows, 1024) layout, full-width stores.
        rows = n // _LANE_WIDTH
        t2d = t.reshape(rows, _LANE_WIDTH)              # bitcast; no extra HBM pass

        # Block rows: cap at ~block_bytes, but shrink so grid >= target_grid steps
        # when the input permits; keep a multiple of 8 (sublane tile) unless the
        # block covers the whole row extent.
        cap_rows = max(8, (block_bytes // itemsize) // _LANE_WIDTH // 8 * 8)
        want_rows = max(8, pl.cdiv(pl.cdiv(rows, target_grid), 8) * 8)
        br = min(cap_rows, want_rows)
        if br > rows:
            br = rows                                    # single full block
        grid = (pl.cdiv(rows, br),)

        out2d = pl.pallas_call(
            _static_volatility_kernel,
            out_shape=jax.ShapeDtypeStruct((rows, _LANE_WIDTH), dtype),
            grid=grid,
            in_specs=[pl.BlockSpec((br, _LANE_WIDTH), lambda i: (i, 0))],
            out_specs=pl.BlockSpec((br, _LANE_WIDTH), lambda i: (i, 0)),
            compiler_params=_compiler_params(),
            cost_estimate=_cost(n, itemsize),
        )(t2d)
        return out2d.reshape(orig_shape)

    # Ragged sizes: 1-D blocks whose length is a multiple of 1024 (lane-aligned);
    # Pallas masks the partial last block, so no pad / slice HBM round trips.
    flat = t.reshape(-1)                                 # bitcast; no extra HBM pass
    cap_units = max(1, (block_bytes // itemsize) // _LANE_WIDTH)
    want_units = max(1, pl.cdiv(pl.cdiv(n, target_grid), _LANE_WIDTH))
    block_elems = min(cap_units, want_units) * _LANE_WIDTH
    grid = (pl.cdiv(n, block_elems),)

    out_flat = pl.pallas_call(
        _static_volatility_kernel,
        out_shape=jax.ShapeDtypeStruct((n,), dtype),
        grid=grid,
        in_specs=[pl.BlockSpec((block_elems,), lambda i: (i,))],
        out_specs=pl.BlockSpec((block_elems,), lambda i: (i,)),
        compiler_params=_compiler_params(),
        cost_estimate=_cost(n, itemsize),
    )(flat)
    return out_flat.reshape(orig_shape)


def _reference(t):
    return jnp.sqrt(
        20.0 * jax.nn.sigmoid(-10.0 + 20.0 * t.astype(jnp.float32))
    ).astype(t.dtype)


if __name__ == "__main__":
    key = jax.random.PRNGKey(0)
    k1, k2, k3, k4 = jax.random.split(key, 4)

    def check(out, t):
        assert out.shape == t.shape and out.dtype == t.dtype
        assert jnp.allclose(out, _reference(t), atol=1e-5, rtol=1e-5)

    # 1) Typical usage: per-sample diffusion time, shape (batch, 1) -> XLA bypass.
    t_small = jax.random.uniform(k1, (2, 1), dtype=jnp.float32)
    out = static_volatility(t_small)
    jax.block_until_ready(out)
    check(out, t_small)

    # 2) Lane-aligned tensor above the threshold -> 2-D Pallas path, 4-step grid.
    t_aligned = jax.random.uniform(k2, (256, 1024), dtype=jnp.float32)
    out = static_volatility(t_aligned)
    jax.block_until_ready(out)
    check(out, t_aligned)

    # 3) Small lane-aligned tensor forced through Pallas -> 2-D path, 2-step grid.
    t_forced = jax.random.uniform(k3, (16, 1024), dtype=jnp.float32)
    out = static_volatility(t_forced, min_pallas_elems=0)
    jax.block_until_ready(out)
    check(out, t_forced)

    # 4) Ragged tensor forced through Pallas -> 1-D path with masked partial block.
    t_ragged = jax.random.uniform(k4, (3, 17, 129), dtype=jnp.float32)
    out = static_volatility(t_ragged, min_pallas_elems=0)
    jax.block_until_ready(out)
    check(out, t_ragged)

    print("KERNEL_OK")
</pallas_src>

<mosaic_0001>
module attributes {stable_mosaic.version = 11 : i64} {
  func.func @_static_volatility_kernel(%arg0: i32, %arg1: memref<64x1024xf32, #tpu.memory_space<vmem>>, %arg2: memref<64x1024xf32, #tpu.memory_space<vmem>>) attributes {dimension_semantics = [#tpu.dimension_semantics<parallel>], iteration_bounds = array<i64: 4>, scalar_prefetch = 0 : i64, scratch_operands = 0 : i64, tpu.core_type = #tpu.core_type<tc>, window_params = [{transform_indices = @transform_0, window_bounds = array<i64: 64, 1024>}, {transform_indices = @transform_1, window_bounds = array<i64: 64, 1024>}]} {
    %c0 = arith.constant 0 : index
    %c0_0 = arith.constant 0 : index
    %0 = vector.load %arg1[%c0, %c0_0] : memref<64x1024xf32, #tpu.memory_space<vmem>>, vector<64x1024xf32>
    %cst = arith.constant 2.000000e+01 : f32
    %1 = vector.broadcast %cst : f32 to vector<64x1024xf32>
    %2 = arith.mulf %1, %0 : vector<64x1024xf32>
    %cst_1 = arith.constant 1.000000e+01 : f32
    %3 = vector.broadcast %cst_1 : f32 to vector<64x1024xf32>
    %4 = arith.subf %2, %3 : vector<64x1024xf32>
    %cst_2 = arith.constant 0.000000e+00 : f32
    %5 = vector.broadcast %cst_2 : f32 to vector<64x1024xf32>
    %6 = arith.subf %5, %4 : vector<64x1024xf32>
    %7 = math.exp %6 : vector<64x1024xf32>
    %cst_3 = arith.constant 1.000000e+00 : f32
    %8 = vector.broadcast %cst_3 : f32 to vector<64x1024xf32>
    %9 = arith.addf %8, %7 : vector<64x1024xf32>
    %10 = math.rsqrt %9 : vector<64x1024xf32>
    %cst_4 = arith.constant 4.47213602 : f32
    %11 = vector.broadcast %cst_4 : f32 to vector<64x1024xf32>
    %12 = arith.mulf %11, %10 : vector<64x1024xf32>
    %c0_5 = arith.constant 0 : index
    %c0_6 = arith.constant 0 : index
    %13 = vector.load %arg2[%c0_5, %c0_6] : memref<64x1024xf32, #tpu.memory_space<vmem>>, vector<64x1024xf32>
    tpu.vector_store %arg2[%c0_5, %c0_6], %12 {strides = array<i32>} : memref<64x1024xf32, #tpu.memory_space<vmem>>, vector<64x1024xf32>,
    return
  }
  func.func @transform_0(%arg0: i32) -> (i32, i32) {
    %c0_i32 = arith.constant 0 : i32
    %c0_i32_0 = arith.constant 0 : i32
    return %arg0, %c0_i32 : i32, i32
  }
  func.func @transform_1(%arg0: i32) -> (i32, i32) {
    %c0_i32 = arith.constant 0 : i32
    %c0_i32_0 = arith.constant 0 : i32
    return %arg0, %c0_i32 : i32, i32
  }
}

</mosaic_0001>

<llo_original>
// kernel: tpu_custom_call.1
$region0: #{tpu_custom_call.1}
  #allocation0 [shape = 'u32[]', space=smem, size = 0x4, offset = 0x4, fixed_abs, tag = 'smem constant byte address 0x4 - core index']
  #allocation1 [shape = 'u32[144,128]{1,0:T(1,128)}', space=vmem, size = 0x12000, scoped, tag = 'internal scratch']
  %s0 = inlined_call_operand.hbm [shape: f32[256,1024], index: 0, kind: input, shape index: {}]
  %s1 = inlined_call_operand.hbm [shape: f32[256,1024], index: 1, kind: output, shape index: {}]
  %s2 = sld [smem:[#allocation0]]
  $region41: #{tpu_custom_call.1} parent=0
    _
  %s4 = ssub.s32 1, %s2
  %s5 = scalar_select 0, %s4, %s2
  $region1: #{tpu_custom_call.1} parent=0
    #allocation2 [shape = 'u8[524288]{0}', space=vmem, size = 0x80000, scoped, tag = 'input window, operand 0']
    #allocation3 [shape = 's32[2]{0}', space=sflag, size = 0x8, scoped, tag = 'scoped memory for tpu_custom_call.1']
    #allocation4 [shape = 's32[2]{0}', space=sflag, size = 0x8, scoped, tag = 'scoped memory for tpu_custom_call.1']
    #allocation5 [shape = 'u8[524288]{0}', space=vmem, size = 0x80000, scoped, tag = 'output window, operand 0']
    %6 = vsyncpa [#allocation3], 0
    %s7 = scalar_lea.sflag [#allocation3], 1
    %8 = vsyncpa %s7, 0
    %9 = vsyncpa [#allocation4], 0
    %s10 = scalar_lea.sflag [#allocation4], 1
    %11 = vsyncpa %s10, 0
    loop: start=0, step=1, limit=6
    $region2: #{tpu_custom_call.1} parent=1 // loop_pre_header
      _
    $region3: #{tpu_custom_call.1} parent=1 // loop_header
      %s13 = sphi 0, %s17
      %p14 = scmp.ge.s32.totalorder %s13, 6
      %s23 = sphi 0, %s25
      %s26 = sphi 0, %s23
      %s27 = sphi 0, %s26
      %s43 = sphi 0, %s27
      %s49 = sphi 0, %s51
      %s52 = sphi 0, %s49
      %s53 = sphi 0, %s52
      %s69 = sphi 0, %s53
    $region4: #{tpu_custom_call.1} parent=1 // loop_header_branch
      %16 = sbr.rel (%p14) target = $region8
    $region5: #{tpu_custom_call.1} parent=1 // loop_body
      %s18 = ssub.s32 %s13, 1
      %s19 = ssub.s32 %s13, 2
      %s20 = sadd.s32 %s13, 1
      %s21 = ssub.s32 %s13, %s20
      %p22 = scmp.eq.s32.totalorder %s21, 0
      %s24 = sadd.s32 %s23, 1
      %s25 = scalar_select %p22, %s23, %s24
      %p28 = pneg %p22
      %p29 = scmp.eq.s32.totalorder %s13, 3
      %p30 = por %p28, %p29
      %p31 = scmp.ne.s32.totalorder %s23, %s26
      %p32 = scmp.eq.s32.totalorder %s13, 0
      %p33 = por %p31, %p32
      %p34 = scmp.ne.s32.totalorder %s23, %s26
      %p35 = scmp.eq.s32.totalorder %s18, 3
      %p36 = por %p34, %p35
      %p37 = scmp.ne.s32.totalorder %s26, %s27
      %p38 = scmp.eq.s32.totalorder %s18, 0
      %p39 = por %p37, %p38
      %p40 = scmp.ne.s32.totalorder %s26, %s27
      %p41 = scmp.eq.s32.totalorder %s19, 3
      %p42 = por %p40, %p41
      %p44 = scmp.ne.s32.totalorder %s27, %s43
      %p45 = scmp.eq.s32.totalorder %s19, 0
      %p46 = por %p44, %p45
      %s47 = ssub.s32 %s13, %s20
      %p48 = scmp.eq.s32.totalorder %s47, 0
      %s50 = sadd.s32 %s49, 1
      %s51 = scalar_select %p48, %s49, %s50
      %p54 = pneg %p48
      %p55 = scmp.eq.s32.totalorder %s13, 3
      %p56 = por %p54, %p55
      %p57 = scmp.ne.s32.totalorder %s49, %s52
      %p58 = scmp.eq.s32.totalorder %s13, 0
      %p59 = por %p57, %p58
      %p60 = scmp.ne.s32.totalorder %s49, %s52
      %p61 = scmp.eq.s32.totalorder %s18, 3
      %p62 = por %p60, %p61
      %p63 = scmp.ne.s32.totalorder %s52, %s53
      %p64 = scmp.eq.s32.totalorder %s18, 0
      %p65 = por %p63, %p64
      %p66 = scmp.ne.s32.totalorder %s52, %s53
      %p67 = scmp.eq.s32.totalorder %s19, 3
      %p68 = por %p66, %p67
      %p70 = scmp.ne.s32.totalorder %s53, %s69
      %p71 = scmp.eq.s32.totalorder %s19, 0
      %p72 = por %p70, %p71
      %p73 = scmp.le.s32.totalorder 1, %s13
      %p74 = scmp.lt.s32.totalorder %s13, 5
      %p75 = pnand %p73, %p74
      %p76 = pneg %p75
      // Predicated region
      $region9: #{tpu_custom_call.1} parent=5 // pred_check
        _
      $region10: #{tpu_custom_call.1} parent=5 // pred_check_branch
        %78 = sbr.rel (%p75) target = $region12
      $region11: #{tpu_custom_call.1} parent=5 // pred_region
        %s79 = ssub.s32 %s13, 1
      $region12: #{tpu_custom_call.1} parent=5 // pred_fallthru
        _
      %p80 = scmp.lt.s32.totalorder %s13, 4
      // Predicated region
      $region13: #{tpu_custom_call.1} parent=5 // pred_check
        %p81 = pneg %p80
      $region14: #{tpu_custom_call.1} parent=5 // pred_check_branch
        %83 = sbr.rel (%p81) target = $region16
      $region15: #{tpu_custom_call.1} parent=5 // pred_region
        // Predicated region
        $region17: #{tpu_custom_call.1} parent=15 // pred_check
          %p84 = pneg %p33
        $region18: #{tpu_custom_call.1} parent=15 // pred_check_branch
          %86 = sbr.rel (%p84) target = $region20
        $region19: #{tpu_custom_call.1} parent=15 // pred_region
          %s87 = sand.u32 %s23, 1
          %s88 = scalar_lea.sflag [#allocation3], %s87
          %s89 = sand.u32 %s23, 1
          %s90 = smul.addr %s89, 512
          %s91 = scalar_lea.vmem [#allocation2], %s90
          %s92 = smul.u32 8, %s13
          %s94 = ssub.s32 8192, 8192
          %95 = vsyncadd %s88, %s94
          %s96 = smul.addr %s92, 8
          %s97 = smul.addr %s96, 128
          %s98 = scalar_lea.hbm %s0, %s97
          %s99 = sshll.u32 %s91, 4
          %s100 = int_to_ptr.vmem [resolvable:$true] %s99
          %105 = dma.hbm_to_vmem [thread:$0]  %s98, 8192, %s100, %s88, 1024, 1024, 64
        $region20: #{tpu_custom_call.1} parent=15 // pred_fallthru
          _
      $region16: #{tpu_custom_call.1} parent=5 // pred_fallthru
        _
      %p106 = scmp.le.s32.totalorder 1, %s13
      %p107 = scmp.lt.s32.totalorder %s13, 5
      %p108 = pnand %p106, %p107
      %p109 = pneg %p108
      // Predicated region
      $region21: #{tpu_custom_call.1} parent=5 // pred_check
        _
      $region22: #{tpu_custom_call.1} parent=5 // pred_check_branch
        %111 = sbr.rel (%p108) target = $region24
      $region23: #{tpu_custom_call.1} parent=5 // pred_region
        %s112 = ssub.s32 %s13, 1
        %s113 = sand.u32 %s26, 1
        %s114 = scalar_lea.sflag [#allocation3], %s113
        %s115 = sand.u32 %s26, 1
        %s116 = smul.addr %s115, 512
        %s117 = scalar_lea.vmem [#allocation2], %s116
        // Predicated region
        $region25: #{tpu_custom_call.1} parent=23 // pred_check
          %p118 = pneg %p39
        $region26: #{tpu_custom_call.1} parent=23 // pred_check_branch
          %120 = sbr.rel (%p118) target = $region28
        $region27: #{tpu_custom_call.1} parent=23 // pred_region
          %121 = dma.done %s114, 8192
        $region28: #{tpu_custom_call.1} parent=23 // pred_fallthru
          _
        %s122 = sand.u32 %s26, 1
        %s123 = scalar_lea.sflag [#allocation3], %s122
        %s124 = sand.u32 %s26, 1
        %s125 = smul.addr %s124, 512
        %s126 = scalar_lea.vmem [#allocation2], %s125
        %p127 = pneg %p39
        %p128 = pneg %p36
        %p129 = pneg %p65
        %p130 = pneg %p62
        %s131 = sand.u32 %s52, 1
        %s132 = scalar_lea.sflag [#allocation4], %s131
        %s133 = sand.u32 %s52, 1
        %s134 = smul.addr %s133, 512
        %s135 = scalar_lea.vmem [#allocation5], %s134
        %s136 = smul.u32 8, %s18
        %s137 = smul.u32 8, %s18
        %v138 = vld [vmem:[%s117] sm:$0xff]
        %v139 = vld [vmem:[%s117 + $0x8] sm:$0xff]
        %v140 = vld [vmem:[%s117 + $0x10] sm:$0xff]
        %v141 = vld [vmem:[%s117 + $0x18] sm:$0xff]
        %v142 = vld [vmem:[%s117 + $0x20] sm:$0xff]
        %v143 = vld [vmem:[%s117 + $0x28] sm:$0xff]
        %v144 = vld [vmem:[%s117 + $0x30] sm:$0xff]
        %v145 = vld [vmem:[%s117 + $0x38] sm:$0xff]
        %v146 = vld [vmem:[%s117 + $0x40] sm:$0xff]
        %v147 = vld [vmem:[%s117 + $0x48] sm:$0xff]
        %v148 = vld [vmem:[%s117 + $0x50] sm:$0xff]
        %v149 = vld [vmem:[%s117 + $0x58] sm:$0xff]
        %v150 = vld [vmem:[%s117 + $0x60] sm:$0xff]
        %v151 = vld [vmem:[%s117 + $0x68] sm:$0xff]
        %v152 = vld [vmem:[%s117 + $0x70] sm:$0xff]
        %v153 = vld [vmem:[%s117 + $0x78] sm:$0xff]
        %v154 = vld [vmem:[%s117 + $0x80] sm:$0xff]
        %v155 = vld [vmem:[%s117 + $0x88] sm:$0xff]
        %v156 = vld [vmem:[%s117 + $0x90] sm:$0xff]
        %v157 = vld [vmem:[%s117 + $0x98] sm:$0xff]
        %v158 = vld [vmem:[%s117 + $0xa0] sm:$0xff]
        %v159 = vld [vmem:[%s117 + $0xa8] sm:$0xff]
        %v160 = vld [vmem:[%s117 + $0xb0] sm:$0xff]
        %v161 = vld [vmem:[%s117 + $0xb8] sm:$0xff]
        %v162 = vld [vmem:[%s117 + $0xc0] sm:$0xff]
        %v163 = vld [vmem:[%s117 + $0xc8] sm:$0xff]
        %v164 = vld [vmem:[%s117 + $0xd0] sm:$0xff]
        %v165 = vld [vmem:[%s117 + $0xd8] sm:$0xff]
        %v166 = vld [vmem:[%s117 + $0xe0] sm:$0xff]
        %v167 = vld [vmem:[%s117 + $0xe8] sm:$0xff]
        %v168 = vld [vmem:[%s117 + $0xf0] sm:$0xff]
        %v169 = vld [vmem:[%s117 + $0xf8] sm:$0xff]
        %v170 = vld [vmem:[%s117 + $0x100] sm:$0xff]
        %v171 = vld [vmem:[%s117 + $0x108] sm:$0xff]
        %v172 = vld [vmem:[%s117 + $0x110] sm:$0xff]
        %v173 = vld [vmem:[%s117 + $0x118] sm:$0xff]
        %v174 = vld [vmem:[%s117 + $0x120] sm:$0xff]
        %v175 = vld [vmem:[%s117 + $0x128] sm:$0xff]
        %v176 = vld [vmem:[%s117 + $0x130] sm:$0xff]
        %v177 = vld [vmem:[%s117 + $0x138] sm:$0xff]
        %v178 = vld [vmem:[%s117 + $0x140] sm:$0xff]
        %v179 = vld [vmem:[%s117 + $0x148] sm:$0xff]
        %v180 = vld [vmem:[%s117 + $0x150] sm:$0xff]
        %v181 = vld [vmem:[%s117 + $0x158] sm:$0xff]
        %v182 = vld [vmem:[%s117 + $0x160] sm:$0xff]
        %v183 = vld [vmem:[%s117 + $0x168] sm:$0xff]
        %v184 = vld [vmem:[%s117 + $0x170] sm:$0xff]
        %v185 = vld [vmem:[%s117 + $0x178] sm:$0xff]
        %v186 = vld [vmem:[%s117 + $0x180] sm:$0xff]
        %v187 = vld [vmem:[%s117 + $0x188] sm:$0xff]
        %v188 = vld [vmem:[%s117 + $0x190] sm:$0xff]
        %v189 = vld [vmem:[%s117 + $0x198] sm:$0xff]
        %v190 = vld [vmem:[%s117 + $0x1a0] sm:$0xff]
        %v191 = vld [vmem:[%s117 + $0x1a8] sm:$0xff]
        %v192 = vld [vmem:[%s117 + $0x1b0] sm:$0xff]
        %v193 = vld [vmem:[%s117 + $0x1b8] sm:$0xff]
        %v194 = vld [vmem:[%s117 + $0x1c0] sm:$0xff]
        %v195 = vld [vmem:[%s117 + $0x1c8] sm:$0xff]
        %v196 = vld [vmem:[%s117 + $0x1d0] sm:$0xff]
        %v197 = vld [vmem:[%s117 + $0x1d8] sm:$0xff]
        %v198 = vld [vmem:[%s117 + $0x1e0] sm:$0xff]
        %v199 = vld [vmem:[%s117 + $0x1e8] sm:$0xff]
        %v200 = vld [vmem:[%s117 + $0x1f0] sm:$0xff]
        %v201 = vld [vmem:[%s117 + $0x1f8] sm:$0xff]
        %v202 = vmul.f32 %v138, 20.0
        %v203 = vmul.f32 %v139, 20.0
        %v204 = vmul.f32 %v140, 20.0
        %v205 = vmul.f32 %v141, 20.0
        %v206 = vmul.f32 %v142, 20.0
        %v207 = vmul.f32 %v143, 20.0
        %v208 = vmul.f32 %v144, 20.0
        %v209 = vmul.f32 %v145, 20.0
        %v210 = vmul.f32 %v146, 20.0
        %v211 = vmul.f32 %v147, 20.0
        %v212 = vmul.f32 %v148, 20.0
        %v213 = vmul.f32 %v149, 20.0
        %v214 = vmul.f32 %v150, 20.0
        %v215 = vmul.f32 %v151, 20.0
        %v216 = vmul.f32 %v152, 20.0
        %v217 = vmul.f32 %v153, 20.0
        %v218 = vmul.f32 %v154, 20.0
        %v219 = vmul.f32 %v155, 20.0
        %v220 = vmul.f32 %v156, 20.0
        %v221 = vmul.f32 %v157, 20.0
        %v222 = vmul.f32 %v158, 20.0
        %v223 = vmul.f32 %v159, 20.0
        %v224 = vmul.f32 %v160, 20.0
        %v225 = vmul.f32 %v161, 20.0
        %v226 = vmul.f32 %v162, 20.0
        %v227 = vmul.f32 %v163, 20.0
        %v228 = vmul.f32 %v164, 20.0
        %v229 = vmul.f32 %v165, 20.0
        %v230 = vmul.f32 %v166, 20.0
        %v231 = vmul.f32 %v167, 20.0
        %v232 = vmul.f32 %v168, 20.0
        %v233 = vmul.f32 %v169, 20.0
        %v234 = vmul.f32 %v170, 20.0
        %v235 = vmul.f32 %v171, 20.0
        %v236 = vmul.f32 %v172, 20.0
        %v237 = vmul.f32 %v173, 20.0
        %v238 = vmul.f32 %v174, 20.0
        %v239 = vmul.f32 %v175, 20.0
        %v240 = vmul.f32 %v176, 20.0
        %v241 = vmul.f32 %v177, 20.0
        %v242 = vmul.f32 %v178, 20.0
        %v243 = vmul.f32 %v179, 20.0
        %v244 = vmul.f32 %v180, 20.0
        %v245 = vmul.f32 %v181, 20.0
        %v246 = vmul.f32 %v182, 20.0
        %v247 = vmul.f32 %v183, 20.0
        %v248 = vmul.f32 %v184, 20.0
        %v249 = vmul.f32 %v185, 20.0
        %v250 = vmul.f32 %v186, 20.0
        %v251 = vmul.f32 %v187, 20.0
        %v252 = vmul.f32 %v188, 20.0
        %v253 = vmul.f32 %v189, 20.0
        %v254 = vmul.f32 %v190, 20.0
        %v255 = vmul.f32 %v191, 20.0
        %v256 = vmul.f32 %v192, 20.0
        %v257 = vmul.f32 %v193, 20.0
        %v258 = vmul.f32 %v194, 20.0
        %v259 = vmul.f32 %v195, 20.0
        %v260 = vmul.f32 %v196, 20.0
        %v261 = vmul.f32 %v197, 20.0
        %v262 = vmul.f32 %v198, 20.0
        %v263 = vmul.f32 %v199, 20.0
        %v264 = vmul.f32 %v200, 20.0
        %v265 = vmul.f32 %v201, 20.0
        %v266 = vsub.f32 %v202, 10.0
        %v267 = vsub.f32 %v203, 10.0
        %v268 = vsub.f32 %v204, 10.0
        %v269 = vsub.f32 %v205, 10.0
        %v270 = vsub.f32 %v206, 10.0
        %v271 = vsub.f32 %v207, 10.0
        %v272 = vsub.f32 %v208, 10.0
        %v273 = vsub.f32 %v209, 10.0
        %v274 = vsub.f32 %v210, 10.0
        %v275 = vsub.f32 %v211, 10.0
        %v276 = vsub.f32 %v212, 10.0
        %v277 = vsub.f32 %v213, 10.0
        %v278 = vsub.f32 %v214, 10.0
        %v279 = vsub.f32 %v215, 10.0
        %v280 = vsub.f32 %v216, 10.0
        %v281 = vsub.f32 %v217, 10.0
        %v282 = vsub.f32 %v218, 10.0
        %v283 = vsub.f32 %v219, 10.0
        %v284 = vsub.f32 %v220, 10.0
        %v285 = vsub.f32 %v221, 10.0
        %v286 = vsub.f32 %v222, 10.0
        %v287 = vsub.f32 %v223, 10.0
        %v288 = vsub.f32 %v224, 10.0
        %v289 = vsub.f32 %v225, 10.0
        %v290 = vsub.f32 %v226, 10.0
        %v291 = vsub.f32 %v227, 10.0
        %v292 = vsub.f32 %v228, 10.0
        %v293 = vsub.f32 %v229, 10.0
        %v294 = vsub.f32 %v230, 10.0
        %v295 = vsub.f32 %v231, 10.0
        %v296 = vsub.f32 %v232, 10.0
        %v297 = vsub.f32 %v233, 10.0
        %v298 = vsub.f32 %v234, 10.0
        %v299 = vsub.f32 %v235, 10.0
        %v300 = vsub.f32 %v236, 10.0
        %v301 = vsub.f32 %v237, 10.0
        %v302 = vsub.f32 %v238, 10.0
        %v303 = vsub.f32 %v239, 10.0
        %v304 = vsub.f32 %v240, 10.0
        %v305 = vsub.f32 %v241, 10.0
        %v306 = vsub.f32 %v242, 10.0
        %v307 = vsub.f32 %v243, 10.0
        %v308 = vsub.f32 %v244, 10.0
        %v309 = vsub.f32 %v245, 10.0
        %v310 = vsub.f32 %v246, 10.0
        %v311 = vsub.f32 %v247, 10.0
        %v312 = vsub.f32 %v248, 10.0
        %v313 = vsub.f32 %v249, 10.0
        %v314 = vsub.f32 %v250, 10.0
        %v315 = vsub.f32 %v251, 10.0
        %v316 = vsub.f32 %v252, 10.0
        %v317 = vsub.f32 %v253, 10.0
        %v318 = vsub.f32 %v254, 10.0
        %v319 = vsub.f32 %v255, 10.0
        %v320 = vsub.f32 %v256, 10.0
        %v321 = vsub.f32 %v257, 10.0
        %v322 = vsub.f32 %v258, 10.0
        %v323 = vsub.f32 %v259, 10.0
        %v324 = vsub.f32 %v260, 10.0
        %v325 = vsub.f32 %v261, 10.0
        %v326 = vsub.f32 %v262, 10.0
        %v327 = vsub.f32 %v263, 10.0
        %v328 = vsub.f32 %v264, 10.0
        %v329 = vsub.f32 %v265, 10.0
        %v330 = vsub.f32 0.0, %v266
        %v331 = vsub.f32 0.0, %v267
        %v332 = vsub.f32 0.0, %v268
        %v333 = vsub.f32 0.0, %v269
        %v334 = vsub.f32 0.0, %v270
        %v335 = vsub.f32 0.0, %v271
        %v336 = vsub.f32 0.0, %v272
        %v337 = vsub.f32 0.0, %v273
        %v338 = vsub.f32 0.0, %v274
        %v339 = vsub.f32 0.0, %v275
        %v340 = vsub.f32 0.0, %v276
        %v341 = vsub.f32 0.0, %v277
        %v342 = vsub.f32 0.0, %v278
        %v343 = vsub.f32 0.0, %v279
        %v344 = vsub.f32 0.0, %v280
        %v345 = vsub.f32 0.0, %v281
        %v346 = vsub.f32 0.0, %v282
        %v347 = vsub.f32 0.0, %v283
        %v348 = vsub.f32 0.0, %v284
        %v349 = vsub.f32 0.0, %v285
        %v350 = vsub.f32 0.0, %v286
        %v351 = vsub.f32 0.0, %v287
        %v352 = vsub.f32 0.0, %v288
        %v353 = vsub.f32 0.0, %v289
        %v354 = vsub.f32 0.0, %v290
        %v355 = vsub.f32 0.0, %v291
        %v356 = vsub.f32 0.0, %v292
        %v357 = vsub.f32 0.0, %v293
        %v358 = vsub.f32 0.0, %v294
        %v359 = vsub.f32 0.0, %v295
        %v360 = vsub.f32 0.0, %v296
        %v361 = vsub.f32 0.0, %v297
        %v362 = vsub.f32 0.0, %v298
        %v363 = vsub.f32 0.0, %v299
        %v364 = vsub.f32 0.0, %v300
        %v365 = vsub.f32 0.0, %v301
        %v366 = vsub.f32 0.0, %v302
        %v367 = vsub.f32 0.0, %v303
        %v368 = vsub.f32 0.0, %v304
        %v369 = vsub.f32 0.0, %v305
        %v370 = vsub.f32 0.0, %v306
        %v371 = vsub.f32 0.0, %v307
        %v372 = vsub.f32 0.0, %v308
        %v373 = vsub.f32 0.0, %v309
        %v374 = vsub.f32 0.0, %v310
        %v375 = vsub.f32 0.0, %v311
        %v376 = vsub.f32 0.0, %v312
        %v377 = vsub.f32 0.0, %v313
        %v378 = vsub.f32 0.0, %v314
        %v379 = vsub.f32 0.0, %v315
        %v380 = vsub.f32 0.0, %v316
        %v381 = vsub.f32 0.0, %v317
        %v382 = vsub.f32 0.0, %v318
        %v383 = vsub.f32 0.0, %v319
        %v384 = vsub.f32 0.0, %v320
        %v385 = vsub.f32 0.0, %v321
        %v386 = vsub.f32 0.0, %v322
        %v387 = vsub.f32 0.0, %v323
        %v388 = vsub.f32 0.0, %v324
        %v389 = vsub.f32 0.0, %v325
        %v390 = vsub.f32 0.0, %v326
        %v391 = vsub.f32 0.0, %v327
        %v392 = vsub.f32 0.0, %v328
        %v393 = vsub.f32 0.0, %v329
        %v394 = vmul.f32 %v330, 1.442695
        %v395 = vpow.pop %v394
        %v396 = vmul.f32 %v331, 1.442695
        %v397 = vpow.pop %v396
        %v398 = vmul.f32 %v332, 1.442695
        %v399 = vpow.pop %v398
        %v400 = vmul.f32 %v333, 1.442695
        %v401 = vpow.pop %v400
        %v402 = vmul.f32 %v334, 1.442695
        %v403 = vpow.pop %v402
        %v404 = vmul.f32 %v335, 1.442695
        %v405 = vpow.pop %v404
        %v406 = vmul.f32 %v336, 1.442695
        %v407 = vpow.pop %v406
        %v408 = vmul.f32 %v337, 1.442695
        %v409 = vpow.pop %v408
        %v410 = vmul.f32 %v338, 1.442695
        %v411 = vpow.pop %v410
        %v412 = vmul.f32 %v339, 1.442695
        %v413 = vpow.pop %v412
        %v414 = vmul.f32 %v340, 1.442695
        %v415 = vpow.pop %v414
        %v416 = vmul.f32 %v341, 1.442695
        %v417 = vpow.pop %v416
        %v418 = vmul.f32 %v342, 1.442695
        %v419 = vpow.pop %v418
        %v420 = vmul.f32 %v343, 1.442695
        %v421 = vpow.pop %v420
        %v422 = vmul.f32 %v344, 1.442695
        %v423 = vpow.pop %v422
        %v424 = vmul.f32 %v345, 1.442695
        %v425 = vpow.pop %v424
        %v426 = vmul.f32 %v346, 1.442695
        %v427 = vpow.pop %v426
        %v428 = vmul.f32 %v347, 1.442695
        %v429 = vpow.pop %v428
        %v430 = vmul.f32 %v348, 1.442695
        %v431 = vpow.pop %v430
        %v432 = vmul.f32 %v349, 1.442695
        %v433 = vpow.pop %v432
        %v434 = vmul.f32 %v350, 1.442695
        %v435 = vpow.pop %v434
        %v436 = vmul.f32 %v351, 1.442695
        %v437 = vpow.pop %v436
        %v438 = vmul.f32 %v352, 1.442695
        %v439 = vpow.pop %v438
        %v440 = vmul.f32 %v353, 1.442695
        %v441 = vpow.pop %v440
        %v442 = vmul.f32 %v354, 1.442695
        %v443 = vpow.pop %v442
        %v444 = vmul.f32 %v355, 1.442695
        %v445 = vpow.pop %v444
        %v446 = vmul.f32 %v356, 1.442695
        %v447 = vpow.pop %v446
        %v448 = vmul.f32 %v357, 1.442695
        %v449 = vpow.pop %v448
        %v450 = vmul.f32 %v358, 1.442695
        %v451 = vpow.pop %v450
        %v452 = vmul.f32 %v359, 1.442695
        %v453 = vpow.pop %v452
        %v454 = vmul.f32 %v360, 1.442695
        %v455 = vpow.pop %v454
        %v456 = vmul.f32 %v361, 1.442695
        %v457 = vpow.pop %v456
        %v458 = vmul.f32 %v362, 1.442695
        %v459 = vpow.pop %v458
        %v460 = vmul.f32 %v363, 1.442695
        %v461 = vpow.pop %v460
        %v462 = vmul.f32 %v364, 1.442695
        %v463 = vpow.pop %v462
        %v464 = vmul.f32 %v365, 1.442695
        %v465 = vpow.pop %v464
        %v466 = vmul.f32 %v366, 1.442695
        %v467 = vpow.pop %v466
        %v468 = vmul.f32 %v367, 1.442695
        %v469 = vpow.pop %v468
        %v470 = vmul.f32 %v368, 1.442695
        %v471 = vpow.pop %v470
        %v472 = vmul.f32 %v369, 1.442695
        %v473 = vpow.pop %v472
        %v474 = vmul.f32 %v370, 1.442695
        %v475 = vpow.pop %v474
        %v476 = vmul.f32 %v371, 1.442695
        %v477 = vpow.pop %v476
        %v478 = vmul.f32 %v372, 1.442695
        %v479 = vpow.pop %v478
        %v480 = vmul.f32 %v373, 1.442695
        %v481 = vpow.pop %v480
        %v482 = vmul.f32 %v374, 1.442695
        %v483 = vpow.pop %v482
        %v484 = vmul.f32 %v375, 1.442695
        %v485 = vpow.pop %v484
        %v486 = vmul.f32 %v376, 1.442695
        %v487 = vpow.pop %v486
        %v488 = vmul.f32 %v377, 1.442695
        %v489 = vpow.pop %v488
        %v490 = vmul.f32 %v378, 1.442695
        %v491 = vpow.pop %v490
        %v492 = vmul.f32 %v379, 1.442695
        %v493 = vpow.pop %v492
        %v494 = vmul.f32 %v380, 1.442695
        %v495 = vpow.pop %v494
        %v496 = vmul.f32 %v381, 1.442695
        %v497 = vpow.pop %v496
        %v498 = vmul.f32 %v382, 1.442695
        %v499 = vpow.pop %v498
        %v500 = vmul.f32 %v383, 1.442695
        %v501 = vpow.pop %v500
        %v502 = vmul.f32 %v384, 1.442695
        %v503 = vpow.pop %v502
        %v504 = vmul.f32 %v385, 1.442695
        %v505 = vpow.pop %v504
        %v506 = vmul.f32 %v386, 1.442695
        %v507 = vpow.pop %v506
        %v508 = vmul.f32 %v387, 1.442695
        %v509 = vpow.pop %v508
        %v510 = vmul.f32 %v388, 1.442695
        %v511 = vpow.pop %v510
        %v512 = vmul.f32 %v389, 1.442695
        %v513 = vpow.pop %v512
        %v514 = vmul.f32 %v390, 1.442695
        %v515 = vpow.pop %v514
        %v516 = vmul.f32 %v391, 1.442695
        %v517 = vpow.pop %v516
        %v518 = vmul.f32 %v392, 1.442695
        %v519 = vpow.pop %v518
        %v520 = vmul.f32 %v393, 1.442695
        %v521 = vpow.pop %v520
        %v522 = vadd.f32 %v395, 1.0
        %v523 = vadd.f32 %v397, 1.0
        %v524 = vadd.f32 %v399, 1.0
        %v525 = vadd.f32 %v401, 1.0
        %v526 = vadd.f32 %v403, 1.0
        %v527 = vadd.f32 %v405, 1.0
        %v528 = vadd.f32 %v407, 1.0
        %v529 = vadd.f32 %v409, 1.0
        %v530 = vadd.f32 %v411, 1.0
        %v531 = vadd.f32 %v413, 1.0
        %v532 = vadd.f32 %v415, 1.0
        %v533 = vadd.f32 %v417, 1.0
        %v534 = vadd.f32 %v419, 1.0
        %v535 = vadd.f32 %v421, 1.0
        %v536 = vadd.f32 %v423, 1.0
        %v537 = vadd.f32 %v425, 1.0
        %v538 = vadd.f32 %v427, 1.0
        %v539 = vadd.f32 %v429, 1.0
        %v540 = vadd.f32 %v431, 1.0
        %v541 = vadd.f32 %v433, 1.0
        %v542 = vadd.f32 %v435, 1.0
        %v543 = vadd.f32 %v437, 1.0
        %v544 = vadd.f32 %v439, 1.0
        %v545 = vadd.f32 %v441, 1.0
        %v546 = vadd.f32 %v443, 1.0
        %v547 = vadd.f32 %v445, 1.0
        %v548 = vadd.f32 %v447, 1.0
        %v549 = vadd.f32 %v449, 1.0
        %v550 = vadd.f32 %v451, 1.0
        %v551 = vadd.f32 %v453, 1.0
        %v552 = vadd.f32 %v455, 1.0
        %v553 = vadd.f32 %v457, 1.0
        %v554 = vadd.f32 %v459, 1.0
        %v555 = vadd.f32 %v461, 1.0
        %v556 = vadd.f32 %v463, 1.0
        %v557 = vadd.f32 %v465, 1.0
        %v558 = vadd.f32 %v467, 1.0
        %v559 = vadd.f32 %v469, 1.0
        %v560 = vadd.f32 %v471, 1.0
        %v561 = vadd.f32 %v473, 1.0
        %v562 = vadd.f32 %v475, 1.0
        %v563 = vadd.f32 %v477, 1.0
        %v564 = vadd.f32 %v479, 1.0
        %v565 = vadd.f32 %v481, 1.0
        %v566 = vadd.f32 %v483, 1.0
        %v567 = vadd.f32 %v485, 1.0
        %v568 = vadd.f32 %v487, 1.0
        %v569 = vadd.f32 %v489, 1.0
        %v570 = vadd.f32 %v491, 1.0
        %v571 = vadd.f32 %v493, 1.0
        %v572 = vadd.f32 %v495, 1.0
        %v573 = vadd.f32 %v497, 1.0
        %v574 = vadd.f32 %v499, 1.0
        %v575 = vadd.f32 %v501, 1.0
        %v576 = vadd.f32 %v503, 1.0
        %v577 = vadd.f32 %v505, 1.0
        %v578 = vadd.f32 %v507, 1.0
        %v579 = vadd.f32 %v509, 1.0
        %v580 = vadd.f32 %v511, 1.0
        %v581 = vadd.f32 %v513, 1.0
        %v582 = vadd.f32 %v515, 1.0
        %v583 = vadd.f32 %v517, 1.0
        %v584 = vadd.f32 %v519, 1.0
        %v585 = vadd.f32 %v521, 1.0
        %v586 = vrsqrt.pop %v522
        %v587 = vrsqrt.pop %v523
        %v588 = vrsqrt.pop %v524
        %v589 = vrsqrt.pop %v525
        %v590 = vrsqrt.pop %v526
        %v591 = vrsqrt.pop %v527
        %v592 = vrsqrt.pop %v528
        %v593 = vrsqrt.pop %v529
        %v594 = vrsqrt.pop %v530
        %v595 = vrsqrt.pop %v531
        %v596 = vrsqrt.pop %v532
        %v597 = vrsqrt.pop %v533
        %v598 = vrsqrt.pop %v534
        %v599 = vrsqrt.pop %v535
        %v600 = vrsqrt.pop %v536
        %v601 = vrsqrt.pop %v537
        %v602 = vrsqrt.pop %v538
        %v603 = vrsqrt.pop %v539
        %v604 = vrsqrt.pop %v540
        %v605 = vrsqrt.pop %v541
        %v606 = vrsqrt.pop %v542
        %v607 = vrsqrt.pop %v543
        %v608 = vrsqrt.pop %v544
        %v609 = vrsqrt.pop %v545
        %v610 = vrsqrt.pop %v546
        %v611 = vrsqrt.pop %v547
        %v612 = vrsqrt.pop %v548
        %v613 = vrsqrt.pop %v549
        %v614 = vrsqrt.pop %v550
        %v615 = vrsqrt.pop %v551
        %v616 = vrsqrt.pop %v552
        %v617 = vrsqrt.pop %v553
        %v618 = vrsqrt.pop %v554
        %v619 = vrsqrt.pop %v555
        %v620 = vrsqrt.pop %v556
        %v621 = vrsqrt.pop %v557
        %v622 = vrsqrt.pop %v558
        %v623 = vrsqrt.pop %v559
        %v624 = vrsqrt.pop %v560
        %v625 = vrsqrt.pop %v561
        %v626 = vrsqrt.pop %v562
        %v627 = vrsqrt.pop %v563
        %v628 = vrsqrt.pop %v564
        %v629 = vrsqrt.pop %v565
        %v630 = vrsqrt.pop %v566
        %v631 = vrsqrt.pop %v567
        %v632 = vrsqrt.pop %v568
        %v633 = vrsqrt.pop %v569
        %v634 = vrsqrt.pop %v570
        %v635 = vrsqrt.pop %v571
        %v636 = vrsqrt.pop %v572
        %v637 = vrsqrt.pop %v573
        %v638 = vrsqrt.pop %v574
        %v639 = vrsqrt.pop %v575
        %v640 = vrsqrt.pop %v576
        %v641 = vrsqrt.pop %v577
        %v642 = vrsqrt.pop %v578
        %v643 = vrsqrt.pop %v579
        %v644 = vrsqrt.pop %v580
        %v645 = vrsqrt.pop %v581
        %v646 = vrsqrt.pop %v582
        %v647 = vrsqrt.pop %v583
        %v648 = vrsqrt.pop %v584
        %v649 = vrsqrt.pop %v585
        %v650 = vmul.f32 %v586, 4.472136
        %v651 = vmul.f32 %v587, 4.472136
        %v652 = vmul.f32 %v588, 4.472136
        %v653 = vmul.f32 %v589, 4.472136
        %v654 = vmul.f32 %v590, 4.472136
        %v655 = vmul.f32 %v591, 4.472136
        %v656 = vmul.f32 %v592, 4.472136
        %v657 = vmul.f32 %v593, 4.472136
        %v658 = vmul.f32 %v594, 4.472136
        %v659 = vmul.f32 %v595, 4.472136
        %v660 = vmul.f32 %v596, 4.472136
        %v661 = vmul.f32 %v597, 4.472136
        %v662 = vmul.f32 %v598, 4.472136
        %v663 = vmul.f32 %v599, 4.472136
        %v664 = vmul.f32 %v600, 4.472136
        %v665 = vmul.f32 %v601, 4.472136
        %v666 = vmul.f32 %v602, 4.472136
        %v667 = vmul.f32 %v603, 4.472136
        %v668 = vmul.f32 %v604, 4.472136
        %v669 = vmul.f32 %v605, 4.472136
        %v670 = vmul.f32 %v606, 4.472136
        %v671 = vmul.f32 %v607, 4.472136
        %v672 = vmul.f32 %v608, 4.472136
        %v673 = vmul.f32 %v609, 4.472136
        %v674 = vmul.f32 %v610, 4.472136
        %v675 = vmul.f32 %v611, 4.472136
        %v676 = vmul.f32 %v612, 4.472136
        %v677 = vmul.f32 %v613, 4.472136
        %v678 = vmul.f32 %v614, 4.472136
        %v679 = vmul.f32 %v615, 4.472136
        %v680 = vmul.f32 %v616, 4.472136
        %v681 = vmul.f32 %v617, 4.472136
        %v682 = vmul.f32 %v618, 4.472136
        %v683 = vmul.f32 %v619, 4.472136
        %v684 = vmul.f32 %v620, 4.472136
        %v685 = vmul.f32 %v621, 4.472136
        %v686 = vmul.f32 %v622, 4.472136
        %v687 = vmul.f32 %v623, 4.472136
        %v688 = vmul.f32 %v624, 4.472136
        %v689 = vmul.f32 %v625, 4.472136
        %v690 = vmul.f32 %v626, 4.472136
        %v691 = vmul.f32 %v627, 4.472136
        %v692 = vmul.f32 %v628, 4.472136
        %v693 = vmul.f32 %v629, 4.472136
        %v694 = vmul.f32 %v630, 4.472136
        %v695 = vmul.f32 %v631, 4.472136
        %v696 = vmul.f32 %v632, 4.472136
        %v697 = vmul.f32 %v633, 4.472136
        %v698 = vmul.f32 %v634, 4.472136
        %v699 = vmul.f32 %v635, 4.472136
        %v700 = vmul.f32 %v636, 4.472136
        %v701 = vmul.f32 %v637, 4.472136
        %v702 = vmul.f32 %v638, 4.472136
        %v703 = vmul.f32 %v639, 4.472136
        %v704 = vmul.f32 %v640, 4.472136
        %v705 = vmul.f32 %v641, 4.472136
        %v706 = vmul.f32 %v642, 4.472136
        %v707 = vmul.f32 %v643, 4.472136
        %v708 = vmul.f32 %v644, 4.472136
        %v709 = vmul.f32 %v645, 4.472136
        %v710 = vmul.f32 %v646, 4.472136
        %v711 = vmul.f32 %v647, 4.472136
        %v712 = vmul.f32 %v648, 4.472136
        %v713 = vmul.f32 %v649, 4.472136
        %714 = vst [vmem:[%s135] sm:$0xff] %v650
        %715 = vst [vmem:[%s135 + $0x8] sm:$0xff] %v651
        %716 = vst [vmem:[%s135 + $0x10] sm:$0xff] %v652
        %717 = vst [vmem:[%s135 + $0x18] sm:$0xff] %v653
        %718 = vst [vmem:[%s135 + $0x20] sm:$0xff] %v654
        %719 = vst [vmem:[%s135 + $0x28] sm:$0xff] %v655
        %720 = vst [vmem:[%s135 + $0x30] sm:$0xff] %v656
        %721 = vst [vmem:[%s135 + $0x38] sm:$0xff] %v657
        %722 = vst [vmem:[%s135 + $0x40] sm:$0xff] %v658
        %723 = vst [vmem:[%s135 + $0x48] sm:$0xff] %v659
        %724 = vst [vmem:[%s135 + $0x50] sm:$0xff] %v660
        %725 = vst [vmem:[%s135 + $0x58] sm:$0xff] %v661
        %726 = vst [vmem:[%s135 + $0x60] sm:$0xff] %v662
        %727 = vst [vmem:[%s135 + $0x68] sm:$0xff] %v663
        %728 = vst [vmem:[%s135 + $0x70] sm:$0xff] %v664
        %729 = vst [vmem:[%s135 + $0x78] sm:$0xff] %v665
        %730 = vst [vmem:[%s135 + $0x80] sm:$0xff] %v666
        %731 = vst [vmem:[%s135 + $0x88] sm:$0xff] %v667
        %732 = vst [vmem:[%s135 + $0x90] sm:$0xff] %v668
        %733 = vst [vmem:[%s135 + $0x98] sm:$0xff] %v669
        %734 = vst [vmem:[%s135 + $0xa0] sm:$0xff] %v670
        %735 = vst [vmem:[%s135 + $0xa8] sm:$0xff] %v671
        %736 = vst [vmem:[%s135 + $0xb0] sm:$0xff] %v672
        %737 = vst [vmem:[%s135 + $0xb8] sm:$0xff] %v673
        %738 = vst [vmem:[%s135 + $0xc0] sm:$0xff] %v674
        %739 = vst [vmem:[%s135 + $0xc8] sm:$0xff] %v675
        %740 = vst [vmem:[%s135 + $0xd0] sm:$0xff] %v676
        %741 = vst [vmem:[%s135 + $0xd8] sm:$0xff] %v677
        %742 = vst [vmem:[%s135 + $0xe0] sm:$0xff] %v678
        %743 = vst [vmem:[%s135 + $0xe8] sm:$0xff] %v679
        %744 = vst [vmem:[%s135 + $0xf0] sm:$0xff] %v680
        %745 = vst [vmem:[%s135 + $0xf8] sm:$0xff] %v681
        %746 = vst [vmem:[%s135 + $0x100] sm:$0xff] %v682
        %747 = vst [vmem:[%s135 + $0x108] sm:$0xff] %v683
        %748 = vst [vmem:[%s135 + $0x110] sm:$0xff] %v684
        %749 = vst [vmem:[%s135 + $0x118] sm:$0xff] %v685
        %750 = vst [vmem:[%s135 + $0x120] sm:$0xff] %v686
        %751 = vst [vmem:[%s135 + $0x128] sm:$0xff] %v687
        %752 = vst [vmem:[%s135 + $0x130] sm:$0xff] %v688
        %753 = vst [vmem:[%s135 + $0x138] sm:$0xff] %v689
        %754 = vst [vmem:[%s135 + $0x140] sm:$0xff] %v690
        %755 = vst [vmem:[%s135 + $0x148] sm:$0xff] %v691
        %756 = vst [vmem:[%s135 + $0x150] sm:$0xff] %v692
        %757 = vst [vmem:[%s135 + $0x158] sm:$0xff] %v693
        %758 = vst [vmem:[%s135 + $0x160] sm:$0xff] %v694
        %759 = vst [vmem:[%s135 + $0x168] sm:$0xff] %v695
        %760 = vst [vmem:[%s135 + $0x170] sm:$0xff] %v696
        %761 = vst [vmem:[%s135 + $0x178] sm:$0xff] %v697
        %762 = vst [vmem:[%s135 + $0x180] sm:$0xff] %v698
        %763 = vst [vmem:[%s135 + $0x188] sm:$0xff] %v699
        %764 = vst [vmem:[%s135 + $0x190] sm:$0xff] %v700
        %765 = vst [vmem:[%s135 + $0x198] sm:$0xff] %v701
        %766 = vst [vmem:[%s135 + $0x1a0] sm:$0xff] %v702
        %767 = vst [vmem:[%s135 + $0x1a8] sm:$0xff] %v703
        %768 = vst [vmem:[%s135 + $0x1b0] sm:$0xff] %v704
        %769 = vst [vmem:[%s135 + $0x1b8] sm:$0xff] %v705
        %770 = vst [vmem:[%s135 + $0x1c0] sm:$0xff] %v706
        %771 = vst [vmem:[%s135 + $0x1c8] sm:$0xff] %v707
        %772 = vst [vmem:[%s135 + $0x1d0] sm:$0xff] %v708
        %773 = vst [vmem:[%s135 + $0x1d8] sm:$0xff] %v709
        %774 = vst [vmem:[%s135 + $0x1e0] sm:$0xff] %v710
        %775 = vst [vmem:[%s135 + $0x1e8] sm:$0xff] %v711
        %776 = vst [vmem:[%s135 + $0x1f0] sm:$0xff] %v712
        %777 = vst [vmem:[%s135 + $0x1f8] sm:$0xff] %v713
        %s778 = sand.u32 %s52, 1
        %s779 = scalar_lea.sflag [#allocation4], %s778
        %s780 = sand.u32 %s52, 1
        %s781 = smul.addr %s780, 512
        %s782 = scalar_lea.vmem [#allocation5], %s781
        // Predicated region
        $region29: #{tpu_custom_call.1} parent=23 // pred_check
          %p783 = pneg %p62
        $region30: #{tpu_custom_call.1} parent=23 // pred_check_branch
          %785 = sbr.rel (%p783) target = $region32
        $region31: #{tpu_custom_call.1} parent=23 // pred_region
          %s786 = smul.u32 8, %s18
          %s788 = ssub.s32 8192, 8192
          %789 = vsyncadd %s779, %s788
          %s790 = smul.addr %s786, 8
          %s791 = smul.addr %s790, 128
          %s792 = scalar_lea.hbm %s1, %s791
          %s793 = sshll.u32 %s782, 4
          %s794 = int_to_ptr.vmem [resolvable:$true] %s793
          %799 = dma.vmem_to_hbm [thread:$0]  %s794, 8192, %s792, %s779, 1024, 1024, 64
        $region32: #{tpu_custom_call.1} parent=23 // pred_fallthru
          _
      $region24: #{tpu_custom_call.1} parent=5 // pred_fallthru
        _
      %p800 = scmp.le.s32.totalorder 2, %s13
      // Predicated region
      $region33: #{tpu_custom_call.1} parent=5 // pred_check
        %p801 = pneg %p800
      $region34: #{tpu_custom_call.1} parent=5 // pred_check_branch
        %803 = sbr.rel (%p801) target = $region36
      $region35: #{tpu_custom_call.1} parent=5 // pred_region
        %s804 = ssub.s32 %s13, 2
        // Predicated region
        $region37: #{tpu_custom_call.1} parent=35 // pred_check
          %p805 = pneg %p68
        $region38: #{tpu_custom_call.1} parent=35 // pred_check_branch
          %807 = sbr.rel (%p805) target = $region40
        $region39: #{tpu_custom_call.1} parent=35 // pred_region
          %s808 = sand.u32 %s53, 1
          %s809 = scalar_lea.sflag [#allocation4], %s808
          %s810 = sand.u32 %s53, 1
          %s811 = smul.addr %s810, 512
          %s812 = scalar_lea.vmem [#allocation5], %s811
          %813 = dma.done %s809, 8192
        $region40: #{tpu_custom_call.1} parent=35 // pred_fallthru
          _
      $region36: #{tpu_custom_call.1} parent=5 // pred_fallthru
        _
    $region6: #{tpu_custom_call.1} parent=1 // loop_footer
      %s17 = sadd.s32 1, %s13
    $region7: #{tpu_custom_call.1} parent=1 // loop_footer_branch
      %12 = sbr.rel target = $region3
    $region8: #{tpu_custom_call.1} parent=1 // loop_exit
      _
    %814 = vsyncpa [#allocation3], 1
    %s815 = scalar_lea.sflag [#allocation3], 1
    %816 = vsyncpa %s815, 1
    %817 = vsyncpa [#allocation4], 1
    %s818 = scalar_lea.sflag [#allocation4], 1
    %819 = vsyncpa %s818, 1

</llo_original>
